<compile_context>
chip_gen: v6e
topology: v6e:2x2x1
jax: 0.10.0
libtpu: 0.0.40
codegen_flags: <defaults>
</compile_context>

<pallas_src>
import jax
import jax.numpy as jnp
from jax import lax
from jax.experimental import pallas as pl
from jax.experimental.pallas import tpu as pltpu

BLOCK_SIZE = 8   # block_size (max sequence length / tril size)
N_EMBD = 32      # n_embd
HEAD_SIZE = 16   # head_size


def head_kernel(x_ref, wqkv_ref, bias_ref, o_ref):
    """One fused self-attention head over `bb` batches flattened into rows.

    x_ref:    (bb*T, C)     activations, batch+time flattened to rows
    wqkv_ref: (C, 3*H)      fused [key | query | value] projection weights
    bias_ref: (bb*T, bb*T)  block-diagonal additive causal mask (0 / -inf)
    o_ref:    (bb*T, H)     output
    """
    H = o_ref.shape[-1]

    # Single fused QKV projection: one MXU push with a 3H-wide (48-lane)
    # result instead of three 16-lane matmuls.
    qkv = jnp.dot(x_ref[...], wqkv_ref[...],
                  preferred_element_type=jnp.float32)           # (bb*T, 3H)

    k = qkv[:, 0 * H:1 * H]                                     # (bb*T, H)
    # Fold the 1/sqrt(H) scale into q (one small vmul) instead of wei.
    q = qkv[:, 1 * H:2 * H] * (H ** -0.5)
    v = qkv[:, 2 * H:3 * H]

    # All batches share one (bb*T, bb*T) score matrix; cross-batch and
    # above-diagonal entries are killed by the precomputed -inf bias, so this
    # is a single 2-D MXU matmul (contract H directly -> no explicit
    # transpose through the XLU) instead of a batched einsum of tiny (T, T)s.
    wei = lax.dot_general(q, k, (((1,), (1,)), ((), ())),
                          preferred_element_type=jnp.float32)   # (bb*T, bb*T)
    wei = wei + bias_ref[...]

    # Numerically-stable softmax; the diagonal is never masked, so every row
    # has a finite entry and the -inf bias cannot produce NaN.
    wei = wei - jnp.max(wei, axis=-1, keepdims=True)
    p = jnp.exp(wei)
    # approx=True lowers the divide to the otherwise-idle EUP vrcp slot.
    p = p * pl.reciprocal(jnp.sum(p, axis=-1, keepdims=True), approx=True)

    out = jnp.dot(p, v, preferred_element_type=jnp.float32)     # (bb*T, H)
    # TODO(synk): single head -> output is only H=16 lanes wide (masked
    # stores); in the full model all heads should be fused here so the output
    # slab is lane-dense (n_head*H >= 128).
    o_ref[...] = out.astype(o_ref.dtype)


def head_forward(x, wk, wq, wv, *, batch_block=None):
    """Single-head causal self-attention (PyTorch `Head.forward`).

    batch_block: batches processed per grid step. Default = B (grid collapsed
    to one step: best on v5e/v6e, which have a single TensorCore and pay
    ~0.35 us per extra step). On v7x (2 TCs) pass batch_block = pl.cdiv(B, 2)
    so the 2-step "parallel" grid feeds both cores.
    """
    B, T, C = x.shape
    H = wk.shape[1]
    if batch_block is None:
        batch_block = B
    bb = batch_block
    assert B % bb == 0, "batch_block must divide B"
    R = bb * T                       # rows handled per grid step

    # Fuse the three projections into one (C, 3H) operand (key|query|value).
    w_qkv = jnp.concatenate([wk, wq, wv], axis=1)               # (C, 3H)

    # Block-diagonal additive causal mask for bb batches packed into one
    # (R, R) score matrix: 0 where same-batch AND key <= query, else -inf.
    r = jnp.arange(R)
    same_batch = (r[:, None] // T) == (r[None, :] // T)
    causal = (r[:, None] % T) >= (r[None, :] % T)
    bias = jnp.where(same_batch & causal, 0.0, -jnp.inf).astype(jnp.float32)

    x2 = x.reshape(B * T, C)

    out = pl.pallas_call(
        head_kernel,
        out_shape=jax.ShapeDtypeStruct((B * T, H), jnp.float32),
        grid_spec=pltpu.PrefetchScalarGridSpec(
            num_scalar_prefetch=0,
            grid=(B // bb,),
            in_specs=[
                pl.BlockSpec((R, C), lambda b: (b, 0)),
                pl.BlockSpec((C, 3 * H), lambda b: (0, 0)),
                pl.BlockSpec((R, R), lambda b: (0, 0)),
            ],
            out_specs=pl.BlockSpec((R, H), lambda b: (b, 0)),
        ),
        compiler_params=pltpu.CompilerParams(
            dimension_semantics=("parallel",)),
    )(x2, w_qkv, bias)
    return out.reshape(B, T, H)


def reference_forward(x, wk, wq, wv):
    k = x @ wk
    q = x @ wq
    v = x @ wv
    wei = (q @ jnp.swapaxes(k, -2, -1)) * (k.shape[-1] ** -0.5)
    T = x.shape[1]
    tril = jnp.tril(jnp.ones((T, T)))
    wei = jnp.where(tril == 0, -jnp.inf, wei)
    wei = jax.nn.softmax(wei, axis=-1)
    return wei @ v


if __name__ == "__main__":
    key = jax.random.PRNGKey(0)
    kx, kk, kq, kv = jax.random.split(key, 4)

    B, T, C, H = 2, BLOCK_SIZE, N_EMBD, HEAD_SIZE
    x = jax.random.normal(kx, (B, T, C), dtype=jnp.float32)
    # deterministic "Linear(bias=False)" weights, stored transposed as (C, H)
    wk = jax.random.normal(kk, (C, H), dtype=jnp.float32) * (C ** -0.5)
    wq = jax.random.normal(kq, (C, H), dtype=jnp.float32) * (C ** -0.5)
    wv = jax.random.normal(kv, (C, H), dtype=jnp.float32) * (C ** -0.5)

    ref = reference_forward(x, wk, wq, wv)

    # Default: collapsed grid (single step) — best on v5e/v6e.
    out = head_forward(x, wk, wq, wv)
    jax.block_until_ready(out)
    assert out.shape == (B, T, H)
    # Tolerance loosened vs 1e-5 because the softmax denominator uses the
    # approximate EUP reciprocal (~1e-4 relative error).
    assert jnp.allclose(out, ref, atol=2e-3, rtol=2e-3), float(
        jnp.max(jnp.abs(out - ref)))

    # v7x-friendly variant: 2-step parallel grid (one batch per TensorCore).
    out2 = head_forward(x, wk, wq, wv, batch_block=pl.cdiv(B, 2))
    jax.block_until_ready(out2)
    assert jnp.allclose(out2, ref, atol=2e-3, rtol=2e-3), float(
        jnp.max(jnp.abs(out2 - ref)))

    print("KERNEL_OK")
</pallas_src>

<mosaic_0001>
module attributes {stable_mosaic.version = 11 : i64} {
  func.func @head_kernel(%arg0: i32, %arg1: memref<16x32xf32, #tpu.memory_space<vmem>>, %arg2: memref<32x48xf32, #tpu.memory_space<vmem>>, %arg3: memref<16x16xf32, #tpu.memory_space<vmem>>, %arg4: memref<16x16xf32, #tpu.memory_space<vmem>>) attributes {dimension_semantics = [#tpu.dimension_semantics<parallel>], iteration_bounds = array<i64: 1>, scalar_prefetch = 0 : i64, scratch_operands = 0 : i64, tpu.core_type = #tpu.core_type<tc>, window_params = [{transform_indices = @transform_0, window_bounds = array<i64: 16, 32>}, {pipeline_mode = #tpu.pipeline_mode<synchronous>, transform_indices = @transform_1, window_bounds = array<i64: 32, 48>}, {pipeline_mode = #tpu.pipeline_mode<synchronous>, transform_indices = @transform_2, window_bounds = array<i64: 16, 16>}, {transform_indices = @transform_3, window_bounds = array<i64: 16, 16>}]} {
    %c0 = arith.constant 0 : index
    %c0_0 = arith.constant 0 : index
    %0 = vector.load %arg1[%c0, %c0_0] : memref<16x32xf32, #tpu.memory_space<vmem>>, vector<16x32xf32>
    %c0_1 = arith.constant 0 : index
    %c0_2 = arith.constant 0 : index
    %1 = vector.load %arg2[%c0_1, %c0_2] : memref<32x48xf32, #tpu.memory_space<vmem>>, vector<32x48xf32>
    %cst = arith.constant dense<0.000000e+00> : vector<16x48xf32>
    %2 = tpu.matmul %0, %1, %cst {dimension_numbers = #tpu.dot_dimension_numbers<[1], [0], [0], [1], [0, 0, 1, 1], [], []>} : vector<16x32xf32>, vector<32x48xf32>, vector<16x48xf32> -> vector<16x48xf32>
    %3 = vector.extract_strided_slice %2 {offsets = [0, 0], sizes = [16, 16], strides = [1, 1]} : vector<16x48xf32> to vector<16x16xf32>
    %4 = vector.extract_strided_slice %2 {offsets = [0, 16], sizes = [16, 16], strides = [1, 1]} : vector<16x48xf32> to vector<16x16xf32>
    %cst_3 = arith.constant 2.500000e-01 : f32
    %5 = vector.broadcast %cst_3 : f32 to vector<16x16xf32>
    %6 = arith.mulf %4, %5 : vector<16x16xf32>
    %7 = vector.extract_strided_slice %2 {offsets = [0, 32], sizes = [16, 16], strides = [1, 1]} : vector<16x48xf32> to vector<16x16xf32>
    %cst_4 = arith.constant dense<0.000000e+00> : vector<16x16xf32>
    %8 = tpu.matmul %6, %3, %cst_4 {dimension_numbers = #tpu.dot_dimension_numbers<[1], [1], [0], [0], [0, 0, 1, 0], [], []>} : vector<16x16xf32>, vector<16x16xf32>, vector<16x16xf32> -> vector<16x16xf32>
    %c0_5 = arith.constant 0 : index
    %c0_6 = arith.constant 0 : index
    %9 = vector.load %arg3[%c0_5, %c0_6] : memref<16x16xf32, #tpu.memory_space<vmem>>, vector<16x16xf32>
    %10 = arith.addf %8, %9 : vector<16x16xf32>
    %cst_7 = arith.constant dense<0xFF800000> : vector<16xf32>
    %11 = vector.multi_reduction <maximumf>, %10, %cst_7 [1] : vector<16x16xf32> to vector<16xf32>
    %12 = vector.shape_cast %11 : vector<16xf32> to vector<16x1xf32>
    %13 = vector.broadcast %12 : vector<16x1xf32> to vector<16x16xf32>
    %14 = arith.subf %10, %13 : vector<16x16xf32>
    %15 = math.exp %14 : vector<16x16xf32>
    %cst_8 = arith.constant dense<0.000000e+00> : vector<16xf32>
    %16 = vector.multi_reduction <add>, %15, %cst_8 [1] : vector<16x16xf32> to vector<16xf32>
    %17 = vector.shape_cast %16 : vector<16xf32> to vector<16x1xf32>
    %18 = tpu.reciprocal %17 {approx = true} : vector<16x1xf32> -> vector<16x1xf32>
    %19 = vector.broadcast %18 : vector<16x1xf32> to vector<16x16xf32>
    %20 = arith.mulf %15, %19 : vector<16x16xf32>
    %cst_9 = arith.constant dense<0.000000e+00> : vector<16x16xf32>
    %21 = tpu.matmul %20, %7, %cst_9 {dimension_numbers = #tpu.dot_dimension_numbers<[1], [0], [0], [1], [0, 0, 1, 1], [], []>} : vector<16x16xf32>, vector<16x16xf32>, vector<16x16xf32> -> vector<16x16xf32>
    %c0_10 = arith.constant 0 : index
    %c0_11 = arith.constant 0 : index
    %22 = vector.load %arg4[%c0_10, %c0_11] : memref<16x16xf32, #tpu.memory_space<vmem>>, vector<16x16xf32>
    tpu.vector_store %arg4[%c0_10, %c0_11], %21 {strides = array<i32>} : memref<16x16xf32, #tpu.memory_space<vmem>>, vector<16x16xf32>,
    return
  }
  func.func @transform_0(%arg0: i32) -> (i32, i32) {
    %c0_i32 = arith.constant 0 : i32
    %c0_i32_0 = arith.constant 0 : i32
    return %arg0, %c0_i32 : i32, i32
  }
  func.func @transform_1(%arg0: i32) -> (i32, i32) {
    %c0_i32 = arith.constant 0 : i32
    %c0_i32_0 = arith.constant 0 : i32
    %c0_i32_1 = arith.constant 0 : i32
    return %c0_i32, %c0_i32_0 : i32, i32
  }
  func.func @transform_2(%arg0: i32) -> (i32, i32) {
    %c0_i32 = arith.constant 0 : i32
    %c0_i32_0 = arith.constant 0 : i32
    %c0_i32_1 = arith.constant 0 : i32
    return %c0_i32, %c0_i32_0 : i32, i32
  }
  func.func @transform_3(%arg0: i32) -> (i32, i32) {
    %c0_i32 = arith.constant 0 : i32
    %c0_i32_0 = arith.constant 0 : i32
    return %arg0, %c0_i32 : i32, i32
  }
}

</mosaic_0001>

<llo_original>
// kernel: tpu_custom_call.1
$region0: #{tpu_custom_call.1}
  #allocation0 [shape = 'u32[]', space=smem, size = 0x4, offset = 0x4, fixed_abs, tag = 'smem constant byte address 0x4 - core index']
  #allocation1 [shape = 'u32[144,128]{1,0:T(1,128)}', space=vmem, size = 0x12000, scoped, tag = 'internal scratch']
  %s0 = inlined_call_operand.hbm [shape: f32[16,32], index: 0, kind: input, shape index: {}]
  %s1 = inlined_call_operand.hbm [shape: f32[32,48], index: 1, kind: input, shape index: {}]
  %s2 = inlined_call_operand.hbm [shape: f32[16,16], index: 2, kind: input, shape index: {}]
  %s3 = inlined_call_operand.hbm [shape: f32[16,16], index: 3, kind: output, shape index: {}]
  %s4 = sld [smem:[#allocation0]]
  $region34: #{tpu_custom_call.1} parent=0
    _
  %s6 = ssub.s32 1, %s4
  %s7 = scalar_select 0, %s6, %s4
  $region1: #{tpu_custom_call.1} parent=0
    #allocation2 [shape = 'u8[8192]{0}', space=vmem, size = 0x2000, scoped, tag = 'input window, operand 0, single buffered']
    #allocation3 [shape = 's32[1]{0}', space=sflag, size = 0x4, scoped, tag = 'scoped memory for tpu_custom_call.1']
    #allocation4 [shape = 's32[1]{0}', space=sflag, size = 0x4, scoped, tag = 'scoped memory for tpu_custom_call.1']
    #allocation5 [shape = 'u8[16384]{0}', space=vmem, size = 0x4000, scoped, tag = 'input window, operand 1, single buffered']
    #allocation6 [shape = 's32[1]{0}', space=sflag, size = 0x4, scoped, tag = 'scoped memory for tpu_custom_call.1']
    #allocation7 [shape = 'u8[8192]{0}', space=vmem, size = 0x2000, scoped, tag = 'input window, operand 2, single buffered']
    #allocation8 [shape = 'u8[8192]{0}', space=vmem, size = 0x2000, scoped, tag = 'output window, operand 0, single buffered']
    %8 = vsyncpa [#allocation3], 0
    %9 = vsyncpa [#allocation6], 0
    %10 = vsyncpa [#allocation4], 0
    // Predicated region
    $region2: #{tpu_custom_call.1} parent=1 // pred_check
      _
    $region3: #{tpu_custom_call.1} parent=1 // pred_check_branch
      %12 = sbr.rel (0) target = $region5
    $region4: #{tpu_custom_call.1} parent=1 // pred_region
      %s14 = ssub.s32 256, 256
      %15 = vsyncadd [#allocation3], %s14
      %s16 = sshll.u32 [#allocation2], 4
      %s17 = int_to_ptr.vmem [resolvable:$true] %s16
      %22 = dma.hbm_to_vmem [thread:$0]  %s0, 256, %s17, [#allocation3], 128, 128, 8
    $region5: #{tpu_custom_call.1} parent=1 // pred_fallthru
      _
    // Predicated region
    $region6: #{tpu_custom_call.1} parent=1 // pred_check
      _
    $region7: #{tpu_custom_call.1} parent=1 // pred_check_branch
      %24 = sbr.rel (0) target = $region9
    $region8: #{tpu_custom_call.1} parent=1 // pred_region
      %s26 = ssub.s32 512, 512
      %27 = vsyncadd [#allocation6], %s26
      %s28 = sshll.u32 [#allocation5], 4
      %s29 = int_to_ptr.vmem [resolvable:$true] %s28
      %34 = dma.hbm_to_vmem [thread:$0]  %s1, 512, %s29, [#allocation6], 128, 128, 8
    $region9: #{tpu_custom_call.1} parent=1 // pred_fallthru
      _
    // Predicated region
    $region10: #{tpu_custom_call.1} parent=1 // pred_check
      _
    $region11: #{tpu_custom_call.1} parent=1 // pred_check_branch
      %36 = sbr.rel (0) target = $region13
    $region12: #{tpu_custom_call.1} parent=1 // pred_region
      %s38 = ssub.s32 256, 256
      %39 = vsyncadd [#allocation6], %s38
      %s40 = sshll.u32 [#allocation7], 4
      %s41 = int_to_ptr.vmem [resolvable:$true] %s40
      %46 = dma.hbm_to_vmem [thread:$0]  %s2, 256, %s41, [#allocation6], 128, 128, 8
    $region13: #{tpu_custom_call.1} parent=1 // pred_fallthru
      _
    // Predicated region
    $region14: #{tpu_custom_call.1} parent=1 // pred_check
      _
    $region15: #{tpu_custom_call.1} parent=1 // pred_check_branch
      %48 = sbr.rel (0) target = $region17
    $region16: #{tpu_custom_call.1} parent=1 // pred_region
      %49 = dma.done [#allocation3], 256
    $region17: #{tpu_custom_call.1} parent=1 // pred_fallthru
      _
    // Predicated region
    $region18: #{tpu_custom_call.1} parent=1 // pred_check
      _
    $region19: #{tpu_custom_call.1} parent=1 // pred_check_branch
      %51 = sbr.rel (0) target = $region21
    $region20: #{tpu_custom_call.1} parent=1 // pred_region
      %52 = dma.done [#allocation6], 512
    $region21: #{tpu_custom_call.1} parent=1 // pred_fallthru
      _
    // Predicated region
    $region22: #{tpu_custom_call.1} parent=1 // pred_check
      _
    $region23: #{tpu_custom_call.1} parent=1 // pred_check_branch
      %54 = sbr.rel (0) target = $region25
    $region24: #{tpu_custom_call.1} parent=1 // pred_region
      %55 = dma.done [#allocation6], 256
    $region25: #{tpu_custom_call.1} parent=1 // pred_fallthru
      _
    %v56 = vld [vmem:[#allocation2] sm:$0xff]
    %v57 = vld [vmem:[#allocation2 + $0x8] sm:$0xff]
    %v58 = vld [vmem:[#allocation5] sm:$0xff]
    %v59 = vld [vmem:[#allocation5 + $0x8] sm:$0xff]
    %v60 = vld [vmem:[#allocation5 + $0x10] sm:$0xff]
    %v61 = vld [vmem:[#allocation5 + $0x18] sm:$0xff]
    %vm62 = vcmask 261120
    %v64 = vsel %vm62, %v56, 0
    %v67 = vsel %vm62, %v57, 0
    %69 = vmatprep.subr.mxu0 0.0
    %70 = vmatpush1.msra.mxu0 0.0
    %71 = vmatprep.subr.mxu0 0.0
    %72 = vmatpush1.msra.mxu0 0.0
    %73 = vmatprep.subr.mxu0 0.0
    %74 = vmatpush1.msra.mxu0 0.0
    %75 = vmatprep.subr.mxu0 0.0
    %76 = vmatpush1.msra.mxu0 0.0
    %77 = vmatprep.subr.mxu0 0.0
    %78 = vmatpush1.msra.mxu0 0.0
    %79 = vmatprep.subr.mxu0 0.0
    %80 = vmatpush1.msra.mxu0 0.0
    %81 = vmatprep.subr.mxu0 0.0
    %82 = vmatpush1.msra.mxu0 0.0
    %83 = vmatprep.subr.mxu0 0.0
    %84 = vmatpush1.msra.mxu0 0.0
    %85 = vmatprep.subr.mxu0 0.0
    %86 = vmatpush1.msra.mxu0 0.0
    %87 = vmatprep.subr.mxu0 0.0
    %88 = vmatpush1.msra.mxu0 0.0
    %89 = vmatprep.subr.mxu0 0.0
    %90 = vmatpush1.msra.mxu0 0.0
    %91 = vmatprep.subr.mxu0 0.0
    %92 = vmatpush1.msra.mxu0 0.0
    %93 = vmatprep.subr.mxu0 0.0
    %94 = vmatpush1.msra.mxu0 %v61
    %95 = vmatprep.subr.mxu0 0.0
    %96 = vmatpush1.msra.mxu0 %v60
    %97 = vmatprep.subr.mxu0 0.0
    %98 = vmatpush1.msra.mxu0 %v59
    %99 = vmatprep.subr.mxu0 0.0
    %100 = vmatpush1.msra.mxu0 %v58
    %101 = vmatprep.subr.mxu0 0.0
    %102 = vmatpush2.msra.mxu0 0.0
    %103 = vmatprep.subr.mxu0 0.0
    %104 = vmatpush2.msra.mxu0 0.0
    %105 = vmatprep.subr.mxu0 0.0
    %106 = vmatpush2.msra.mxu0 0.0
    %107 = vmatprep.subr.mxu0 0.0
    %108 = vmatpush2.msra.mxu0 0.0
    %109 = vmatprep.subr.mxu0 0.0
    %110 = vmatpush2.msra.mxu0 0.0
    %111 = vmatprep.subr.mxu0 0.0
    %112 = vmatpush2.msra.mxu0 0.0
    %113 = vmatprep.subr.mxu0 0.0
    %114 = vmatpush2.msra.mxu0 0.0
    %115 = vmatprep.subr.mxu0 0.0
    %116 = vmatpush2.msra.mxu0 0.0
    %117 = vmatprep.subr.mxu0 0.0
    %118 = vmatpush2.msra.mxu0 0.0
    %119 = vmatprep.subr.mxu0 0.0
    %120 = vmatpush2.msra.mxu0 0.0
    %121 = vmatprep.subr.mxu0 0.0
    %122 = vmatpush2.msra.mxu0 0.0
    %123 = vmatprep.subr.mxu0 0.0
    %124 = vmatpush2.msra.mxu0 0.0
    %125 = vmatprep.subr.mxu0 0.0
    %126 = vmatpush2.msra.mxu0 0.0
    %127 = vmatprep.subr.mxu0 0.0
    %128 = vmatpush2.msra.mxu0 0.0
    %129 = vmatprep.subr.mxu0 0.0
    %130 = vmatpush2.msra.mxu0 0.0
    %131 = vmatprep.subr.mxu0 0.0
    %132 = vmatpush2.msra.mxu0 0.0
    %133 = vmatprep.mubr.f32.mxu0 0.0
    %134 = vmatmul.mubr.f32.gmra.mxu0 %v64
    %v135 = vpop.f32.mrf.mxu0
    %v136 = vadd.f32 0.0, %v135
    %v137 = vpop.f32.mrf.mxu0
    %138 = vmatprep.mubr.f32.mxu0 0.0
    %139 = vmatmul.mubr.f32.gmra.mxu0 %v67
    %v140 = vpop.f32.mrf.mxu0
    %v141 = vadd.f32 0.0, %v140
    %v142 = vpop.f32.mrf.mxu0
    %143 = vdwg.mxu0
    %v144 = vmul.f32 %v136, 0.25
    %v145 = vmul.f32 %v141, 0.25
    %v146 = vld [vmem:[#allocation7] sm:$0xff]
    %v147 = vld [vmem:[#allocation7 + $0x8] sm:$0xff]
    %150 = vrot.lane.b32.xlu0 %v144, 112
    %v151 = vpop.permute.xlu0 %150
    %152 = vrot.lane.b32.xlu0 %v145, 112
    %v153 = vpop.permute.xlu0 %152
    %vm154 = vcmask 130048
    %v155 = vsel %vm154, %v151, 0
    %v157 = vsel %vm154, %v153, 0
    %v160 = vsel %vm154, %v136, 0
    %v163 = vsel %vm154, %v141, 0
    %165 = vmatprep.subr.mxu0 0.0
    %166 = vmatpush1.xpose.msra.mxu0 0.0
    %167 = vmatprep.subr.mxu0 0.0
    %168 = vmatpush1.xpose.msra.mxu0 0.0
    %169 = vmatprep.subr.mxu0 0.0
    %170 = vmatpush1.xpose.msra.mxu0 0.0
    %171 = vmatprep.subr.mxu0 0.0
    %172 = vmatpush1.xpose.msra.mxu0 0.0
    %173 = vmatprep.subr.mxu0 0.0
    %174 = vmatpush1.xpose.msra.mxu0 0.0
    %175 = vmatprep.subr.mxu0 0.0
    %176 = vmatpush1.xpose.msra.mxu0 0.0
    %177 = vmatprep.subr.mxu0 0.0
    %178 = vmatpush1.xpose.msra.mxu0 0.0
    %179 = vmatprep.subr.mxu0 0.0
    %180 = vmatpush1.xpose.msra.mxu0 0.0
    %181 = vmatprep.subr.mxu0 0.0
    %182 = vmatpush1.xpose.msra.mxu0 0.0
    %183 = vmatprep.subr.mxu0 0.0
    %184 = vmatpush1.xpose.msra.mxu0 0.0
    %185 = vmatprep.subr.mxu0 0.0
    %186 = vmatpush1.xpose.msra.mxu0 0.0
    %187 = vmatprep.subr.mxu0 0.0
    %188 = vmatpush1.xpose.msra.mxu0 0.0
    %189 = vmatprep.subr.mxu0 0.0
    %190 = vmatpush1.xpose.msra.mxu0 0.0
    %191 = vmatprep.subr.mxu0 0.0
    %192 = vmatpush1.xpose.msra.mxu0 0.0
    %193 = vmatprep.subr.mxu0 0.0
    %194 = vmatpush1.xpose.msra.mxu0 %v163
    %195 = vmatprep.subr.mxu0 0.0
    %196 = vmatpush1.xpose.msra.mxu0 %v160
    %197 = vmatprep.subr.mxu0 0.0
    %198 = vmatpush2.xpose.msra.mxu0 0.0
    %199 = vmatprep.subr.mxu0 0.0
    %200 = vmatpush2.xpose.msra.mxu0 0.0
    %201 = vmatprep.subr.mxu0 0.0
    %202 = vmatpush2.xpose.msra.mxu0 0.0
    %203 = vmatprep.subr.mxu0 0.0
    %204 = vmatpush2.xpose.msra.mxu0 0.0
    %205 = vmatprep.subr.mxu0 0.0
    %206 = vmatpush2.xpose.msra.mxu0 0.0
    %207 = vmatprep.subr.mxu0 0.0
    %208 = vmatpush2.xpose.msra.mxu0 0.0
    %209 = vmatprep.subr.mxu0 0.0
    %210 = vmatpush2.xpose.msra.mxu0 0.0
    %211 = vmatprep.subr.mxu0 0.0
    %212 = vmatpush2.xpose.msra.mxu0 0.0
    %213 = vmatprep.subr.mxu0 0.0
    %214 = vmatpush2.xpose.msra.mxu0 0.0
    %215 = vmatprep.subr.mxu0 0.0
    %216 = vmatpush2.xpose.msra.mxu0 0.0
    %217 = vmatprep.subr.mxu0 0.0
    %218 = vmatpush2.xpose.msra.mxu0 0.0
    %219 = vmatprep.subr.mxu0 0.0
    %220 = vmatpush2.xpose.msra.mxu0 0.0
    %221 = vmatprep.subr.mxu0 0.0
    %222 = vmatpush2.xpose.msra.mxu0 0.0
    %223 = vmatprep.subr.mxu0 0.0
    %224 = vmatpush2.xpose.msra.mxu0 0.0
    %225 = vmatprep.subr.mxu0 0.0
    %226 = vmatpush2.xpose.msra.mxu0 0.0
    %227 = vmatprep.subr.mxu0 0.0
    %228 = vmatpush2.xpose.msra.mxu0 0.0
    %229 = vmatprep.mubr.f32.mxu0 0.0
    %230 = vmatmul.mubr.f32.gmra.mxu0 %v155
    %v231 = vpop.f32.mrf.mxu0
    %v232 = vadd.f32 %v146, %v231
    %v233 = vpop.f32.mrf.mxu0
    %234 = vmatprep.mubr.f32.mxu0 0.0
    %235 = vmatmul.mubr.f32.gmra.mxu0 %v157
    %v236 = vpop.f32.mrf.mxu0
    %v237 = vadd.f32 %v147, %v236
    %v238 = vpop.f32.mrf.mxu0
    %239 = vdwg.mxu0
    %v240 = vsel %vm154, %v232, -inf
    %241 = vmax.xlane.f32.xlu0 %v240
    %v242 = vpop.xlane.xlu0 %241
    %v243 = vsel %vm154, %v237, -inf
    %244 = vmax.xlane.f32.xlu0 %v243
    %v245 = vpop.xlane.xlu0 %244
    %v246 = vsub.f32 %v232, %v242
    %v247 = vsub.f32 %v237, %v245
    %v248 = vmul.f32 %v246, 1.442695
    %v249 = vpow.pop %v248
    %v250 = vmul.f32 %v247, 1.442695
    %v251 = vpow.pop %v250
    %v252 = vsel %vm154, %v249, 0.0
    %253 = vadd.xlane.f32.xlu0 %v252
    %v254 = vpop.xlane.xlu0 %253
    %v255 = vsel %vm154, %v251, 0.0
    %256 = vadd.xlane.f32.xlu0 %v255
    %v257 = vpop.xlane.xlu0 %256
    %v258 = vrcp.pop %v254
    %v259 = vrcp.pop %v257
    %v260 = vmul.f32 %v249, %v258
    %v261 = vmul.f32 %v251, %v259
    %262 = vrot.lane.b32.xlu0 %v136, 96
    %v263 = vpop.permute.xlu0 %262
    %264 = vrot.lane.b32.xlu0 %v141, 96
    %v265 = vpop.permute.xlu0 %264
    %v269 = vsel %vm154, %v260, 0
    %v272 = vsel %vm154, %v261, 0
    %274 = vmatprep.subr.mxu0 0.0
    %275 = vmatpush1.msra.mxu0 0.0
    %276 = vmatprep.subr.mxu0 0.0
    %277 = vmatpush1.msra.mxu0 0.0
    %278 = vmatprep.subr.mxu0 0.0
    %279 = vmatpush1.msra.mxu0 0.0
    %280 = vmatprep.subr.mxu0 0.0
    %281 = vmatpush1.msra.mxu0 0.0
    %282 = vmatprep.subr.mxu0 0.0
    %283 = vmatpush1.msra.mxu0 0.0
    %284 = vmatprep.subr.mxu0 0.0
    %285 = vmatpush1.msra.mxu0 0.0
    %286 = vmatprep.subr.mxu0 0.0
    %287 = vmatpush1.msra.mxu0 0.0
    %288 = vmatprep.subr.mxu0 0.0
    %289 = vmatpush1.msra.mxu0 0.0
    %290 = vmatprep.subr.mxu0 0.0
    %291 = vmatpush1.msra.mxu0 0.0
    %292 = vmatprep.subr.mxu0 0.0
    %293 = vmatpush1.msra.mxu0 0.0
    %294 = vmatprep.subr.mxu0 0.0
    %295 = vmatpush1.msra.mxu0 0.0
    %296 = vmatprep.subr.mxu0 0.0
    %297 = vmatpush1.msra.mxu0 0.0
    %298 = vmatprep.subr.mxu0 0.0
    %299 = vmatpush1.msra.mxu0 0.0
    %300 = vmatprep.subr.mxu0 0.0
    %301 = vmatpush1.msra.mxu0 0.0
    %302 = vmatprep.subr.mxu0 0.0
    %303 = vmatpush1.msra.mxu0 %v265
    %304 = vmatprep.subr.mxu0 0.0
    %305 = vmatpush1.msra.mxu0 %v263
    %306 = vmatprep.subr.mxu0 0.0
    %307 = vmatpush2.msra.mxu0 0.0
    %308 = vmatprep.subr.mxu0 0.0
    %309 = vmatpush2.msra.mxu0 0.0
    %310 = vmatprep.subr.mxu0 0.0
    %311 = vmatpush2.msra.mxu0 0.0
    %312 = vmatprep.subr.mxu0 0.0
    %313 = vmatpush2.msra.mxu0 0.0
    %314 = vmatprep.subr.mxu0 0.0
    %315 = vmatpush2.msra.mxu0 0.0
    %316 = vmatprep.subr.mxu0 0.0
    %317 = vmatpush2.msra.mxu0 0.0
    %318 = vmatprep.subr.mxu0 0.0
    %319 = vmatpush2.msra.mxu0 0.0
    %320 = vmatprep.subr.mxu0 0.0
    %321 = vmatpush2.msra.mxu0 0.0
    %322 = vmatprep.subr.mxu0 0.0
    %323 = vmatpush2.msra.mxu0 0.0
    %324 = vmatprep.subr.mxu0 0.0
    %325 = vmatpush2.msra.mxu0 0.0
    %326 = vmatprep.subr.mxu0 0.0
    %327 = vmatpush2.msra.mxu0 0.0
    %328 = vmatprep.subr.mxu0 0.0
    %329 = vmatpush2.msra.mxu0 0.0
    %330 = vmatprep.subr.mxu0 0.0
    %331 = vmatpush2.msra.mxu0 0.0
    %332 = vmatprep.subr.mxu0 0.0
    %333 = vmatpush2.msra.mxu0 0.0
    %334 = vmatprep.subr.mxu0 0.0
    %335 = vmatpush2.msra.mxu0 0.0
    %336 = vmatprep.subr.mxu0 0.0
    %337 = vmatpush2.msra.mxu0 0.0
    %338 = vmatprep.mubr.f32.mxu0 0.0
    %339 = vmatmul.mubr.f32.gmra.mxu0 %v269
    %v340 = vpop.f32.mrf.mxu0
    %v341 = vadd.f32 0.0, %v340
    %v342 = vpop.f32.mrf.mxu0
    %343 = vmatprep.mubr.f32.mxu0 0.0
    %344 = vmatmul.mubr.f32.gmra.mxu0 %v272
    %v345 = vpop.f32.mrf.mxu0
    %v346 = vadd.f32 0.0, %v345
    %v347 = vpop.f32.mrf.mxu0
    %348 = vdwg.mxu0
    %349 = vst.msk [vmem:[#allocation8] sm:$0xff] %vm154, %v341
    %350 = vst.msk [vmem:[#allocation8 + $0x8] sm:$0xff] %vm154, %v346
    // Predicated region
    $region26: #{tpu_custom_call.1} parent=1 // pred_check
      _
    $region27: #{tpu_custom_call.1} parent=1 // pred_check_branch
      %352 = sbr.rel (0) target = $region29
    $region28: #{tpu_custom_call.1} parent=1 // pred_region
      %s354 = ssub.s32 256, 256
      %355 = vsyncadd [#allocation4], %s354
      %s356 = sshll.u32 [#allocation8], 4
      %s357 = int_to_ptr.vmem [resolvable:$true] %s356
      %362 = dma.vmem_to_hbm [thread:$0]  %s357, 256, %s3, [#allocation4], 128, 128, 8
    $region29: #{tpu_custom_call.1} parent=1 // pred_fallthru
      _
    // Predicated region
    $region30: #{tpu_custom_call.1} parent=1 // pred_check
      _
    $region31: #{tpu_custom_call.1} parent=1 // pred_check_branch
      %364 = sbr.rel (0) target = $region33
    $region32: #{tpu_custom_call.1} parent=1 // pred_region
      %365 = dma.done [#allocation4], 256
    $region33: #{tpu_custom_call.1} parent=1 // pred_fallthru
      _
    %366 = vsyncpa [#allocation3], 1
    %367 = vsyncpa [#allocation6], 1
    %368 = vsyncpa [#allocation4], 1

</llo_original>
